<compile_context>
chip_gen: v7x
topology: tpu7x:2x2x1
jax: 0.10.0
libtpu: 0.0.40
codegen_flags: <defaults>
</compile_context>

<pallas_src>
import jax
import jax.numpy as jnp
import numpy as np
from jax.experimental import pallas as pl
from jax.experimental.pallas import tpu as pltpu

N_LETTERS = 7 + 1   # matches the PyTorch module
_BIAS_PAD = 8       # rows of the appended "bias tap" (keeps concats 8-aligned)


def _round8(n):
    return ((n + 7) // 8) * 8


def _make_kernel(meta):
    B, NL, C, K, L = meta["B"], meta["NL"], meta["C"], meta["K"], meta["L"]
    o_w1, o_w2, o_w3, o_weff, o_b4 = meta["row_offs"]
    BC, BNL = B * C, B * NL
    w1_cols = K * BNL + _BIAS_PAD
    w23_cols = K * BC + _BIAS_PAD

    def kernel(idx_rep_ref, slab_ref, out_ref):
        # ---- one-hot encode all batches (constant lane width L) -------------
        idx_rep = idx_rep_ref[...]                                   # (B*NL, L) i32
        row = jax.lax.broadcasted_iota(jnp.int32, (BNL, L), 0)
        letter = (row & (NL - 1)) if (NL & (NL - 1)) == 0 else (row % NL)
        onehot = (idx_rep == letter).astype(jnp.float32)             # (B*NL, L)

        # bias tap: row 0 = ones, rows 1..7 = zeros (hoisted, built once)
        bias_tap = (jax.lax.broadcasted_iota(jnp.int32, (_BIAS_PAD, L), 0) == 0
                    ).astype(jnp.float32)

        def taps(x):
            # K left-shifted copies at CONSTANT lane width L (wrapped tail
            # columns are finite garbage, masked by W_eff before reduction),
            # plus the bias tap so the bias add rides the MXU.
            pieces = [x] + [jnp.roll(x, -k, axis=1) for k in range(1, K)]
            pieces.append(bias_tap)
            return jnp.concatenate(pieces, axis=0)                   # (K*rows+8, L)

        def conv(x, w):
            y = jnp.dot(w, taps(x), preferred_element_type=jnp.float32)
            return jnp.maximum(y, 0.0)                               # ReLU (layers 1-3)

        # conv1 has the embedding table pre-folded into its merged weight.
        h = conv(onehot, slab_ref[o_w1:o_w1 + BC, 0:w1_cols])        # (B*C, L)
        h = conv(h,      slab_ref[o_w2:o_w2 + BC, 0:w23_cols])       # (B*C, L)
        h = conv(h,      slab_ref[o_w3:o_w3 + BC, 0:w23_cols])       # (B*C, L)

        # ---- conv4 + both stride-2s + final sum, folded into a mask ---------
        prod = slab_ref[o_weff:o_weff + BC, 0:L] * h                 # (B*C, L)  VPU
        lane_sum = jnp.sum(prod, axis=1, keepdims=True)              # (B*C, 1)  XLU
        parts = [jnp.sum(lane_sum[b * C:(b + 1) * C, :], axis=0, keepdims=True)
                 for b in range(B)]                                  # sublane group sums
        out_ref[...] = (jnp.concatenate(parts, axis=0)
                        + slab_ref[o_b4:o_b4 + B, 0:1])              # (B, 1) one store

    return kernel


def pack_params(emb_table, conv_ws, conv_bs, B, L):
    """One-time host-side packing of every constant operand into a single
    lane-dense f32 slab.  Call once per set of weights and reuse the result."""
    emb = jnp.asarray(emb_table, jnp.float32)
    NL, E = emb.shape
    C, _, K = conv_ws[0].shape
    eyeB = jnp.eye(B, dtype=jnp.float32)

    L1 = L - K + 1
    L2 = L1 - K + 1
    Lout3 = (L2 - K) // 2 + 1           # conv3 stride-2 length
    Lout4 = (Lout3 - K) // 2 + 1        # conv4 stride-2 length

    def merged(w, b, fold=None):
        # (Cout, Cin, K) -> (B*Cout, K*B*Cin' + 8): block-diagonal over batch,
        # K taps stacked along columns, bias (+7 zero cols) appended.
        w = jnp.asarray(w, jnp.float32)
        cols = []
        for k in range(K):
            wk = w[:, :, k]
            if fold is not None:
                wk = wk @ fold                                    # (Cout, NL)
            cols.append(jnp.kron(eyeB, wk))
        bias_col = jnp.tile(jnp.asarray(b, jnp.float32), B)[:, None]
        bias_blk = jnp.concatenate(
            [bias_col, jnp.zeros((bias_col.shape[0], _BIAS_PAD - 1), jnp.float32)],
            axis=1)
        return jnp.concatenate(cols + [bias_blk], axis=1)

    W1 = merged(conv_ws[0], conv_bs[0], fold=emb.T)   # (B*C, K*B*NL + 8)
    W2 = merged(conv_ws[1], conv_bs[1])               # (B*C, K*B*C + 8)
    W3 = merged(conv_ws[2], conv_bs[2])               # (B*C, K*B*C + 8)

    # conv4 + stride-2 of layers 3 & 4 + trailing sum folded into a mask over
    # the stride-1 conv3 output:
    #   out_b = sum_{c,l} W_eff[c,l] * relu(conv3_full)[b,c,l] + Lout4 * b4
    M = np.zeros((K, L), np.float32)                  # structural tap placement
    for j in range(Lout4):
        for k in range(K):
            M[k, 2 * (2 * j + k)] += 1.0
    w4 = jnp.asarray(conv_ws[3], jnp.float32)[0]      # (C, K)
    W_eff_big = jnp.tile(w4 @ jnp.asarray(M), (B, 1))   # (B*C, L), zero tail cols

    b4tot = (jnp.full((B, 1), float(Lout4), jnp.float32)
             * jnp.asarray(conv_bs[3], jnp.float32)[0])               # (B, 1)

    blocks = [W1, W2, W3, W_eff_big, b4tot]
    row_offs, off = [], 0
    for blk in blocks:
        row_offs.append(off)
        off += _round8(int(blk.shape[0]))
    max_w = max(int(blk.shape[1]) for blk in blocks)
    lanes = ((max_w + 127) // 128) * 128              # lane-dense slab width
    slab = jnp.zeros((off, lanes), jnp.float32)
    for blk, ro in zip(blocks, row_offs):
        slab = slab.at[ro:ro + blk.shape[0], 0:blk.shape[1]].set(blk)

    meta = dict(B=B, NL=NL, E=E, C=C, K=K, L=L,
                row_offs=tuple(row_offs), slab_shape=(off, lanes))
    return slab, meta


def build_forward(meta):
    """Returns a jitted forward(idx, slab) -> (B,) callable."""
    B, NL, C, K, L = meta["B"], meta["NL"], meta["C"], meta["K"], meta["L"]
    BC, BNL = B * C, B * NL
    rows, lanes = meta["slab_shape"]

    flops = 2 * BC * L * ((K * BNL + _BIAS_PAD) + 2 * (K * BC + _BIAS_PAD)) + 3 * BC * L
    bytes_accessed = BNL * L * 4 + rows * lanes * 4 + B * 4
    vmem = pl.BlockSpec(memory_space=pltpu.MemorySpace.VMEM)

    call = pl.pallas_call(
        _make_kernel(meta),
        out_shape=jax.ShapeDtypeStruct((B, 1), jnp.float32),
        in_specs=[vmem, vmem],
        out_specs=vmem,
        cost_estimate=pl.CostEstimate(flops=int(flops), transcendentals=0,
                                      bytes_accessed=int(bytes_accessed)),
    )

    @jax.jit
    def forward(idx, slab):
        idx_rep = jnp.repeat(jnp.asarray(idx, jnp.int32), NL, axis=0)  # (B*NL, L)
        return call(idx_rep, slab)[:, 0]                               # (B,)

    return forward


def reference(idx, emb_table, conv_ws, conv_bs):
    h = emb_table[idx]                       # (B, L, E)
    h = jnp.transpose(h, (0, 2, 1))          # (B, E, L)  == NCW
    strides = (1, 1, 2, 2)
    for i, (w, b, s) in enumerate(zip(conv_ws, conv_bs, strides)):
        h = jax.lax.conv_general_dilated(
            h, w, (s,), 'VALID', dimension_numbers=('NCH', 'OIH', 'NCH'))
        h = h + b[None, :, None]
        if i < 3:
            h = jnp.maximum(h, 0.0)
    return jnp.sum(h, axis=-1)[:, 0]


if __name__ == "__main__":
    B, L = 2, 24          # batch, sequence length
    E, C = 8, 8           # embedding_dim, n_channels

    key = jax.random.PRNGKey(0)
    keys = jax.random.split(key, 10)

    idx = jax.random.randint(keys[0], (B, L), 0, N_LETTERS, dtype=jnp.int32)
    emb_table = jax.random.normal(keys[1], (N_LETTERS, E), jnp.float32)

    def conv_init(kw, kb, cout, cin, ksz=3):
        bound = 1.0 / np.sqrt(cin * ksz)
        w = jax.random.uniform(kw, (cout, cin, ksz), jnp.float32, -bound, bound)
        b = jax.random.uniform(kb, (cout,), jnp.float32, -bound, bound)
        return w, b

    w1, b1 = conv_init(keys[2], keys[3], C, E)
    w2, b2 = conv_init(keys[4], keys[5], C, C)
    w3, b3 = conv_init(keys[6], keys[7], C, C)
    w4, b4 = conv_init(keys[8], keys[9], 1, C)
    ws = [w1, w2, w3, w4]
    bs = [b1, b2, b3, b4]

    # One-time packing (cached), then a jitted 2-input forward.
    slab, meta = pack_params(emb_table, ws, bs, B, L)
    forward = build_forward(meta)

    out = jax.block_until_ready(forward(idx, slab))

    ref = reference(idx, emb_table, ws, bs)
    np.testing.assert_allclose(np.asarray(out), np.asarray(ref),
                               rtol=1e-5, atol=1e-5)
    print("KERNEL_OK")
</pallas_src>

<mosaic_0001>
module attributes {stable_mosaic.version = 11 : i64} {
  func.func @kernel(%arg0: memref<16x24xi32, #tpu.memory_space<vmem>>, %arg1: memref<72x128xf32, #tpu.memory_space<vmem>>, %arg2: memref<2x1xf32, #tpu.memory_space<vmem>>) attributes {dimension_semantics = [], scalar_prefetch = 0 : i64, scratch_operands = 0 : i64, tpu.core_type = #tpu.core_type<tc>} {
    %c0 = arith.constant 0 : index
    %c0_0 = arith.constant 0 : index
    %0 = vector.load %arg0[%c0, %c0_0] : memref<16x24xi32, #tpu.memory_space<vmem>>, vector<16x24xi32>
    %1 = tpu.iota {dimensions = array<i32: 0>} : vector<16x24xi32>
    %c7_i32 = arith.constant 7 : i32
    %2 = vector.broadcast %c7_i32 : i32 to vector<16x24xi32>
    %3 = arith.andi %1, %2 : vector<16x24xi32>
    %4 = arith.cmpi eq, %0, %3 : vector<16x24xi32>
    %5 = arith.extui %4 : vector<16x24xi1> to vector<16x24xi32>
    %6 = arith.sitofp %5 : vector<16x24xi32> to vector<16x24xf32>
    %7 = tpu.iota {dimensions = array<i32: 0>} : vector<8x24xi32>
    %c0_i32 = arith.constant 0 : i32
    %8 = vector.broadcast %c0_i32 : i32 to vector<8x24xi32>
    %9 = arith.cmpi eq, %7, %8 : vector<8x24xi32>
    %10 = arith.extui %9 : vector<8x24xi1> to vector<8x24xi32>
    %11 = arith.sitofp %10 : vector<8x24xi32> to vector<8x24xf32>
    %c0_1 = arith.constant 0 : index
    %c0_2 = arith.constant 0 : index
    %12 = vector.load %arg1[%c0_1, %c0_2] : memref<72x128xf32, #tpu.memory_space<vmem>>, vector<16x56xf32>
    %13 = vector.extract_strided_slice %6 {offsets = [0, 1], sizes = [16, 23], strides = [1, 1]} : vector<16x24xf32> to vector<16x23xf32>
    %14 = vector.extract_strided_slice %6 {offsets = [0, 0], sizes = [16, 1], strides = [1, 1]} : vector<16x24xf32> to vector<16x1xf32>
    %15 = tpu.concatenate %13, %14 in 1 : vector<16x23xf32>, vector<16x1xf32> -> vector<16x24xf32>
    %16 = vector.extract_strided_slice %6 {offsets = [0, 2], sizes = [16, 22], strides = [1, 1]} : vector<16x24xf32> to vector<16x22xf32>
    %17 = vector.extract_strided_slice %6 {offsets = [0, 0], sizes = [16, 2], strides = [1, 1]} : vector<16x24xf32> to vector<16x2xf32>
    %18 = tpu.concatenate %16, %17 in 1 : vector<16x22xf32>, vector<16x2xf32> -> vector<16x24xf32>
    %19 = tpu.concatenate %6, %15, %18, %11 in 0 : vector<16x24xf32>, vector<16x24xf32>, vector<16x24xf32>, vector<8x24xf32> -> vector<56x24xf32>
    %cst = arith.constant dense<0.000000e+00> : vector<16x24xf32>
    %20 = tpu.matmul %12, %19, %cst {dimension_numbers = #tpu.dot_dimension_numbers<[1], [0], [0], [1], [0, 0, 1, 1], [], []>} : vector<16x56xf32>, vector<56x24xf32>, vector<16x24xf32> -> vector<16x24xf32>
    %cst_3 = arith.constant 0.000000e+00 : f32
    %21 = vector.broadcast %cst_3 : f32 to vector<16x24xf32>
    %22 = arith.maximumf %20, %21 : vector<16x24xf32>
    %c16 = arith.constant 16 : index
    %c0_4 = arith.constant 0 : index
    %23 = vector.load %arg1[%c16, %c0_4] : memref<72x128xf32, #tpu.memory_space<vmem>>, vector<16x56xf32>
    %24 = vector.extract_strided_slice %22 {offsets = [0, 1], sizes = [16, 23], strides = [1, 1]} : vector<16x24xf32> to vector<16x23xf32>
    %25 = vector.extract_strided_slice %22 {offsets = [0, 0], sizes = [16, 1], strides = [1, 1]} : vector<16x24xf32> to vector<16x1xf32>
    %26 = tpu.concatenate %24, %25 in 1 : vector<16x23xf32>, vector<16x1xf32> -> vector<16x24xf32>
    %27 = vector.extract_strided_slice %22 {offsets = [0, 2], sizes = [16, 22], strides = [1, 1]} : vector<16x24xf32> to vector<16x22xf32>
    %28 = vector.extract_strided_slice %22 {offsets = [0, 0], sizes = [16, 2], strides = [1, 1]} : vector<16x24xf32> to vector<16x2xf32>
    %29 = tpu.concatenate %27, %28 in 1 : vector<16x22xf32>, vector<16x2xf32> -> vector<16x24xf32>
    %30 = tpu.concatenate %22, %26, %29, %11 in 0 : vector<16x24xf32>, vector<16x24xf32>, vector<16x24xf32>, vector<8x24xf32> -> vector<56x24xf32>
    %cst_5 = arith.constant dense<0.000000e+00> : vector<16x24xf32>
    %31 = tpu.matmul %23, %30, %cst_5 {dimension_numbers = #tpu.dot_dimension_numbers<[1], [0], [0], [1], [0, 0, 1, 1], [], []>} : vector<16x56xf32>, vector<56x24xf32>, vector<16x24xf32> -> vector<16x24xf32>
    %cst_6 = arith.constant 0.000000e+00 : f32
    %32 = vector.broadcast %cst_6 : f32 to vector<16x24xf32>
    %33 = arith.maximumf %31, %32 : vector<16x24xf32>
    %c32 = arith.constant 32 : index
    %c0_7 = arith.constant 0 : index
    %34 = vector.load %arg1[%c32, %c0_7] : memref<72x128xf32, #tpu.memory_space<vmem>>, vector<16x56xf32>
    %35 = vector.extract_strided_slice %33 {offsets = [0, 1], sizes = [16, 23], strides = [1, 1]} : vector<16x24xf32> to vector<16x23xf32>
    %36 = vector.extract_strided_slice %33 {offsets = [0, 0], sizes = [16, 1], strides = [1, 1]} : vector<16x24xf32> to vector<16x1xf32>
    %37 = tpu.concatenate %35, %36 in 1 : vector<16x23xf32>, vector<16x1xf32> -> vector<16x24xf32>
    %38 = vector.extract_strided_slice %33 {offsets = [0, 2], sizes = [16, 22], strides = [1, 1]} : vector<16x24xf32> to vector<16x22xf32>
    %39 = vector.extract_strided_slice %33 {offsets = [0, 0], sizes = [16, 2], strides = [1, 1]} : vector<16x24xf32> to vector<16x2xf32>
    %40 = tpu.concatenate %38, %39 in 1 : vector<16x22xf32>, vector<16x2xf32> -> vector<16x24xf32>
    %41 = tpu.concatenate %33, %37, %40, %11 in 0 : vector<16x24xf32>, vector<16x24xf32>, vector<16x24xf32>, vector<8x24xf32> -> vector<56x24xf32>
    %cst_8 = arith.constant dense<0.000000e+00> : vector<16x24xf32>
    %42 = tpu.matmul %34, %41, %cst_8 {dimension_numbers = #tpu.dot_dimension_numbers<[1], [0], [0], [1], [0, 0, 1, 1], [], []>} : vector<16x56xf32>, vector<56x24xf32>, vector<16x24xf32> -> vector<16x24xf32>
    %cst_9 = arith.constant 0.000000e+00 : f32
    %43 = vector.broadcast %cst_9 : f32 to vector<16x24xf32>
    %44 = arith.maximumf %42, %43 : vector<16x24xf32>
    %c48 = arith.constant 48 : index
    %c0_10 = arith.constant 0 : index
    %45 = vector.load %arg1[%c48, %c0_10] : memref<72x128xf32, #tpu.memory_space<vmem>>, vector<16x24xf32>
    %46 = arith.mulf %45, %44 : vector<16x24xf32>
    %cst_11 = arith.constant dense<0.000000e+00> : vector<16xf32>
    %47 = vector.multi_reduction <add>, %46, %cst_11 [1] : vector<16x24xf32> to vector<16xf32>
    %48 = vector.shape_cast %47 : vector<16xf32> to vector<16x1xf32>
    %49 = vector.extract_strided_slice %48 {offsets = [0, 0], sizes = [8, 1], strides = [1, 1]} : vector<16x1xf32> to vector<8x1xf32>
    %cst_12 = arith.constant dense<0.000000e+00> : vector<1xf32>
    %50 = vector.multi_reduction <add>, %49, %cst_12 [0] : vector<8x1xf32> to vector<1xf32>
    %51 = vector.shape_cast %50 : vector<1xf32> to vector<1x1xf32>
    %52 = vector.extract_strided_slice %48 {offsets = [8, 0], sizes = [8, 1], strides = [1, 1]} : vector<16x1xf32> to vector<8x1xf32>
    %cst_13 = arith.constant dense<0.000000e+00> : vector<1xf32>
    %53 = vector.multi_reduction <add>, %52, %cst_13 [0] : vector<8x1xf32> to vector<1xf32>
    %54 = vector.shape_cast %53 : vector<1xf32> to vector<1x1xf32>
    %55 = tpu.concatenate %51, %54 in 0 : vector<1x1xf32>, vector<1x1xf32> -> vector<2x1xf32>
    %c64 = arith.constant 64 : index
    %c0_14 = arith.constant 0 : index
    %56 = vector.load %arg1[%c64, %c0_14] : memref<72x128xf32, #tpu.memory_space<vmem>>, vector<2x1xf32>
    %57 = arith.addf %55, %56 : vector<2x1xf32>
    %c0_15 = arith.constant 0 : index
    %c0_16 = arith.constant 0 : index
    %58 = vector.load %arg2[%c0_15, %c0_16] : memref<2x1xf32, #tpu.memory_space<vmem>>, vector<2x1xf32>
    tpu.vector_store %arg2[%c0_15, %c0_16], %57 {strides = array<i32>} : memref<2x1xf32, #tpu.memory_space<vmem>>, vector<2x1xf32>,
    return
  }
}

</mosaic_0001>

<llo_original>
// kernel: forward.1
$region0: #{forward.1}
  #allocation0 [shape = 'u32[]', space=smem, size = 0x4, offset = 0x4, fixed_abs, tag = 'smem constant byte address 0x4 - core index']
  #allocation1 [shape = 'u32[144,128]{1,0:T(1,128)}', space=vmem, size = 0x12000, scoped, tag = 'internal scratch']
  %s0 = inlined_call_operand.vmem [shape: s32[16,24], index: 0, kind: input, shape index: {}]
  %s1 = inlined_call_operand.hbm [shape: f32[72,128], index: 1, kind: input, shape index: {}]
  %s2 = inlined_call_operand.vmem [shape: f32[2,1], index: 2, kind: output, shape index: {}]
  %s3 = sld [smem:[#allocation0]]
  $region22: #{forward.1} parent=0
    _
  %s5 = ssub.s32 1, %s3
  %s6 = scalar_select 0, %s5, %s3
  $region1: #{forward.1} parent=0
    #allocation2 [shape = 'u8[36864]{0}', space=vmem, size = 0x9000, scoped, tag = 'input window, operand 1, single buffered']
    #allocation3 [shape = 's32[1]{0}', space=sflag, size = 0x4, scoped, tag = 'scoped memory for forward.1']
    %7 = vsyncpa [#allocation3], 0
    // Predicated region
    $region2: #{forward.1} parent=1 // pred_check
      _
    $region3: #{forward.1} parent=1 // pred_check_branch
      %9 = sbr.rel (0) target = $region5
    $region4: #{forward.1} parent=1 // pred_region
      _
    $region5: #{forward.1} parent=1 // pred_fallthru
      _
    // Predicated region
    $region6: #{forward.1} parent=1 // pred_check
      _
    $region7: #{forward.1} parent=1 // pred_check_branch
      %11 = sbr.rel (0) target = $region9
    $region8: #{forward.1} parent=1 // pred_region
      %s13 = ssub.s32 1152, 1152
      %14 = vsyncadd [#allocation3], %s13
      %s15 = sshll.u32 [#allocation2], 4
      %s16 = int_to_ptr.vmem [resolvable:$true] %s15
      %21 = dma.hbm_to_vmem [thread:$0]  %s1, 1152, %s16, [#allocation3], 128, 128, 8
    $region9: #{forward.1} parent=1 // pred_fallthru
      _
    // Predicated region
    $region10: #{forward.1} parent=1 // pred_check
      _
    $region11: #{forward.1} parent=1 // pred_check_branch
      %23 = sbr.rel (0) target = $region13
    $region12: #{forward.1} parent=1 // pred_region
      %24 = dma.done [#allocation3], 1152
    $region13: #{forward.1} parent=1 // pred_fallthru
      _
    %v25 = vld [vmem:[%s0] sm:$0xff]
    %v26 = vld [vmem:[%s0 + $0x8] sm:$0xff]
    %v27 = vlaneseq
    %v28 = vshrl.u32 %v27, 7
    %v29 = vadd.s32 %v28, 8
    %v30 = vand.u32 %v28, 7
    %v31 = vand.u32 %v29, 7
    %vm32 = vcmp.eq.s32.totalorder %v25, %v30
    %vm33 = vcmp.eq.s32.totalorder %v26, %v31
    %v34 = vsel %vm32, 1, 0
    %v35 = vsel %vm33, 1, 0
    %v36 = vcvt.s32.f32 %v34
    %v37 = vcvt.s32.f32 %v35
    %vm38 = vcmp.eq.s32.totalorder %v28, 0
    %v39 = vsel %vm38, 1, 0
    %v40 = vcvt.s32.f32 %v39
    %v41 = vld [vmem:[#allocation2] sm:$0xff]
    %v42 = vld [vmem:[#allocation2 + $0x8] sm:$0xff]
    %45 = vrot.lane.b32.xlu0 %v36, 127
    %v46 = vpop.permute.xlu0 %45
    %47 = vrot.lane.b32.xlu0 %v37, 127
    %v48 = vpop.permute.xlu0 %47
    %51 = vrot.lane.b32.xlu0 %v36, 23
    %v52 = vpop.permute.xlu0 %51
    %53 = vrot.lane.b32.xlu0 %v37, 23
    %v54 = vpop.permute.xlu0 %53
    %vm57 = vcmask 187392
    %v58 = vsel %vm57, %v46, %v52
    %v59 = vsel %vm57, %v48, %v54
    %60 = vrot.lane.b32.xlu0 %v36, 126
    %v61 = vpop.permute.xlu0 %60
    %62 = vrot.lane.b32.xlu0 %v37, 126
    %v63 = vpop.permute.xlu0 %62
    %66 = vrot.lane.b32.xlu0 %v36, 22
    %v67 = vpop.permute.xlu0 %66
    %68 = vrot.lane.b32.xlu0 %v37, 22
    %v69 = vpop.permute.xlu0 %68
    %vm72 = vcmask 179200
    %v73 = vsel %vm72, %v61, %v67
    %v74 = vsel %vm72, %v63, %v69
    %vm75 = vcmask 457728
    %v77 = vsel %vm75, %v41, 0
    %v80 = vsel %vm75, %v42, 0
    %82 = vmatprep.subr.mxu0 0.0
    %83 = vmatpush1.msra.mxu0 %v36
    %84 = vmatprep.subr.mxu0 0.0
    %85 = vmatpush1.msra.mxu0 %v37
    %86 = vmatprep.subr.mxu0 0.0
    %87 = vmatpush1.msra.mxu0 %v58
    %88 = vmatprep.subr.mxu0 0.0
    %89 = vmatpush1.msra.mxu0 %v59
    %90 = vmatprep.subr.mxu0 0.0
    %91 = vmatpush1.msra.mxu0 %v73
    %92 = vmatprep.subr.mxu0 0.0
    %93 = vmatpush1.msra.mxu0 %v74
    %94 = vmatprep.subr.mxu0 0.0
    %95 = vmatpush1.msra.mxu0 %v40
    %96 = vmatprep.subr.mxu0 0.0
    %97 = vmatpush1.msra.mxu0 0.0
    %98 = vmatprep.subr.mxu0 0.0
    %99 = vmatpush1.msra.mxu0 0.0
    %100 = vmatprep.subr.mxu0 0.0
    %101 = vmatpush1.msra.mxu0 0.0
    %102 = vmatprep.subr.mxu0 0.0
    %103 = vmatpush1.msra.mxu0 0.0
    %104 = vmatprep.subr.mxu0 0.0
    %105 = vmatpush1.msra.mxu0 0.0
    %106 = vmatprep.subr.mxu0 0.0
    %107 = vmatpush1.msra.mxu0 0.0
    %108 = vmatprep.subr.mxu0 0.0
    %109 = vmatpush1.msra.mxu0 0.0
    %110 = vmatprep.subr.mxu0 0.0
    %111 = vmatpush1.msra.mxu0 0.0
    %112 = vmatprep.subr.mxu0 0.0
    %113 = vmatpush1.msra.mxu0 0.0
    %114 = vmatprep.subr.mxu0 0.0
    %115 = vmatpush1.msra.mxu0 0.0
    %116 = vmatprep.subr.mxu0 0.0
    %117 = vmatpush1.msra.mxu0 0.0
    %118 = vmatprep.subr.mxu0 0.0
    %119 = vmatpush1.msra.mxu0 0.0
    %120 = vmatprep.subr.mxu0 0.0
    %121 = vmatpush1.msra.mxu0 0.0
    %122 = vmatprep.subr.mxu0 0.0
    %123 = vmatpush1.msra.mxu0 0.0
    %124 = vmatprep.subr.mxu0 0.0
    %125 = vmatpush1.msra.mxu0 0.0
    %126 = vmatprep.subr.mxu0 0.0
    %127 = vmatpush1.msra.mxu0 0.0
    %128 = vmatprep.subr.mxu0 0.0
    %129 = vmatpush1.msra.mxu0 0.0
    %130 = vmatprep.subr.mxu0 0.0
    %131 = vmatpush1.msra.mxu0 0.0
    %132 = vmatprep.subr.mxu0 0.0
    %133 = vmatpush1.msra.mxu0 0.0
    %134 = vmatprep.subr.mxu0 0.0
    %135 = vmatpush1.msra.mxu0 0.0
    %136 = vmatprep.subr.mxu0 0.0
    %137 = vmatpush1.msra.mxu0 0.0
    %138 = vmatprep.subr.mxu0 0.0
    %139 = vmatpush1.msra.mxu0 0.0
    %140 = vmatprep.subr.mxu0 0.0
    %141 = vmatpush1.msra.mxu0 0.0
    %142 = vmatprep.subr.mxu0 0.0
    %143 = vmatpush1.msra.mxu0 0.0
    %144 = vmatprep.subr.mxu0 0.0
    %145 = vmatpush1.msra.mxu0 0.0
    %146 = vmatprep.mubr.f32.mxu0 0.0
    %147 = vmatmul.mubr.f32.gmra.mrb[0].mxu0 %v77
    %v148 = vpop.f32.mrb[0].mxu0
    %v149 = vadd.f32 0.0, %v148
    %v150 = vpop.f32.mrb[0].mxu0
    %151 = vmatprep.mubr.f32.mxu0 0.0
    %152 = vmatmul.mubr.f32.gmra.mrb[0].mxu0 %v80
    %v153 = vpop.f32.mrb[0].mxu0
    %v154 = vadd.f32 0.0, %v153
    %v155 = vpop.f32.mrb[0].mxu0
    %156 = vdwg.mxu0
    %v157 = vmax.f32 %v149, 0.0
    %v158 = vmax.f32 %v154, 0.0
    %v159 = vld [vmem:[#allocation2 + $0x10] sm:$0xff]
    %v160 = vld [vmem:[#allocation2 + $0x18] sm:$0xff]
    %163 = vrot.lane.b32.xlu0 %v157, 127
    %v164 = vpop.permute.xlu0 %163
    %165 = vrot.lane.b32.xlu0 %v158, 127
    %v166 = vpop.permute.xlu0 %165
    %169 = vrot.lane.b32.xlu0 %v157, 23
    %v170 = vpop.permute.xlu0 %169
    %171 = vrot.lane.b32.xlu0 %v158, 23
    %v172 = vpop.permute.xlu0 %171
    %v175 = vsel %vm57, %v164, %v170
    %v176 = vsel %vm57, %v166, %v172
    %177 = vrot.lane.b32.xlu0 %v157, 126
    %v178 = vpop.permute.xlu0 %177
    %179 = vrot.lane.b32.xlu0 %v158, 126
    %v180 = vpop.permute.xlu0 %179
    %183 = vrot.lane.b32.xlu0 %v157, 22
    %v184 = vpop.permute.xlu0 %183
    %185 = vrot.lane.b32.xlu0 %v158, 22
    %v186 = vpop.permute.xlu0 %185
    %v189 = vsel %vm72, %v178, %v184
    %v190 = vsel %vm72, %v180, %v186
    %v192 = vsel %vm75, %v159, 0
    %v195 = vsel %vm75, %v160, 0
    %197 = vmatprep.subr.mxu0 0.0
    %198 = vmatpush1.msra.mxu0 %v157
    %199 = vmatprep.subr.mxu0 0.0
    %200 = vmatpush1.msra.mxu0 %v158
    %201 = vmatprep.subr.mxu0 0.0
    %202 = vmatpush1.msra.mxu0 %v175
    %203 = vmatprep.subr.mxu0 0.0
    %204 = vmatpush1.msra.mxu0 %v176
    %205 = vmatprep.subr.mxu0 0.0
    %206 = vmatpush1.msra.mxu0 %v189
    %207 = vmatprep.subr.mxu0 0.0
    %208 = vmatpush1.msra.mxu0 %v190
    %209 = vmatprep.subr.mxu0 0.0
    %210 = vmatpush1.msra.mxu0 %v40
    %211 = vmatprep.subr.mxu0 0.0
    %212 = vmatpush1.msra.mxu0 0.0
    %213 = vmatprep.subr.mxu0 0.0
    %214 = vmatpush1.msra.mxu0 0.0
    %215 = vmatprep.subr.mxu0 0.0
    %216 = vmatpush1.msra.mxu0 0.0
    %217 = vmatprep.subr.mxu0 0.0
    %218 = vmatpush1.msra.mxu0 0.0
    %219 = vmatprep.subr.mxu0 0.0
    %220 = vmatpush1.msra.mxu0 0.0
    %221 = vmatprep.subr.mxu0 0.0
    %222 = vmatpush1.msra.mxu0 0.0
    %223 = vmatprep.subr.mxu0 0.0
    %224 = vmatpush1.msra.mxu0 0.0
    %225 = vmatprep.subr.mxu0 0.0
    %226 = vmatpush1.msra.mxu0 0.0
    %227 = vmatprep.subr.mxu0 0.0
    %228 = vmatpush1.msra.mxu0 0.0
    %229 = vmatprep.subr.mxu0 0.0
    %230 = vmatpush1.msra.mxu0 0.0
    %231 = vmatprep.subr.mxu0 0.0
    %232 = vmatpush1.msra.mxu0 0.0
    %233 = vmatprep.subr.mxu0 0.0
    %234 = vmatpush1.msra.mxu0 0.0
    %235 = vmatprep.subr.mxu0 0.0
    %236 = vmatpush1.msra.mxu0 0.0
    %237 = vmatprep.subr.mxu0 0.0
    %238 = vmatpush1.msra.mxu0 0.0
    %239 = vmatprep.subr.mxu0 0.0
    %240 = vmatpush1.msra.mxu0 0.0
    %241 = vmatprep.subr.mxu0 0.0
    %242 = vmatpush1.msra.mxu0 0.0
    %243 = vmatprep.subr.mxu0 0.0
    %244 = vmatpush1.msra.mxu0 0.0
    %245 = vmatprep.subr.mxu0 0.0
    %246 = vmatpush1.msra.mxu0 0.0
    %247 = vmatprep.subr.mxu0 0.0
    %248 = vmatpush1.msra.mxu0 0.0
    %249 = vmatprep.subr.mxu0 0.0
    %250 = vmatpush1.msra.mxu0 0.0
    %251 = vmatprep.subr.mxu0 0.0
    %252 = vmatpush1.msra.mxu0 0.0
    %253 = vmatprep.subr.mxu0 0.0
    %254 = vmatpush1.msra.mxu0 0.0
    %255 = vmatprep.subr.mxu0 0.0
    %256 = vmatpush1.msra.mxu0 0.0
    %257 = vmatprep.subr.mxu0 0.0
    %258 = vmatpush1.msra.mxu0 0.0
    %259 = vmatprep.subr.mxu0 0.0
    %260 = vmatpush1.msra.mxu0 0.0
    %261 = vmatprep.mubr.f32.mxu0 0.0
    %262 = vmatmul.mubr.f32.gmra.mrb[0].mxu0 %v192
    %v263 = vpop.f32.mrb[0].mxu0
    %v264 = vadd.f32 0.0, %v263
    %v265 = vpop.f32.mrb[0].mxu0
    %266 = vmatprep.mubr.f32.mxu0 0.0
    %267 = vmatmul.mubr.f32.gmra.mrb[0].mxu0 %v195
    %v268 = vpop.f32.mrb[0].mxu0
    %v269 = vadd.f32 0.0, %v268
    %v270 = vpop.f32.mrb[0].mxu0
    %271 = vdwg.mxu0
    %v272 = vmax.f32 %v264, 0.0
    %v273 = vmax.f32 %v269, 0.0
    %v274 = vld [vmem:[#allocation2 + $0x20] sm:$0xff]
    %v275 = vld [vmem:[#allocation2 + $0x28] sm:$0xff]
    %278 = vrot.lane.b32.xlu0 %v272, 127
    %v279 = vpop.permute.xlu0 %278
    %280 = vrot.lane.b32.xlu0 %v273, 127
    %v281 = vpop.permute.xlu0 %280
    %284 = vrot.lane.b32.xlu0 %v272, 23
    %v285 = vpop.permute.xlu0 %284
    %286 = vrot.lane.b32.xlu0 %v273, 23
    %v287 = vpop.permute.xlu0 %286
    %v290 = vsel %vm57, %v279, %v285
    %v291 = vsel %vm57, %v281, %v287
    %292 = vrot.lane.b32.xlu0 %v272, 126
    %v293 = vpop.permute.xlu0 %292
    %294 = vrot.lane.b32.xlu0 %v273, 126
    %v295 = vpop.permute.xlu0 %294
    %298 = vrot.lane.b32.xlu0 %v272, 22
    %v299 = vpop.permute.xlu0 %298
    %300 = vrot.lane.b32.xlu0 %v273, 22
    %v301 = vpop.permute.xlu0 %300
    %v304 = vsel %vm72, %v293, %v299
    %v305 = vsel %vm72, %v295, %v301
    %v307 = vsel %vm75, %v274, 0
    %v310 = vsel %vm75, %v275, 0
    %312 = vmatprep.subr.mxu0 0.0
    %313 = vmatpush1.msra.mxu0 %v272
    %314 = vmatprep.subr.mxu0 0.0
    %315 = vmatpush1.msra.mxu0 %v273
    %316 = vmatprep.subr.mxu0 0.0
    %317 = vmatpush1.msra.mxu0 %v290
    %318 = vmatprep.subr.mxu0 0.0
    %319 = vmatpush1.msra.mxu0 %v291
    %320 = vmatprep.subr.mxu0 0.0
    %321 = vmatpush1.msra.mxu0 %v304
    %322 = vmatprep.subr.mxu0 0.0
    %323 = vmatpush1.msra.mxu0 %v305
    %324 = vmatprep.subr.mxu0 0.0
    %325 = vmatpush1.msra.mxu0 %v40
    %326 = vmatprep.subr.mxu0 0.0
    %327 = vmatpush1.msra.mxu0 0.0
    %328 = vmatprep.subr.mxu0 0.0
    %329 = vmatpush1.msra.mxu0 0.0
    %330 = vmatprep.subr.mxu0 0.0
    %331 = vmatpush1.msra.mxu0 0.0
    %332 = vmatprep.subr.mxu0 0.0
    %333 = vmatpush1.msra.mxu0 0.0
    %334 = vmatprep.subr.mxu0 0.0
    %335 = vmatpush1.msra.mxu0 0.0
    %336 = vmatprep.subr.mxu0 0.0
    %337 = vmatpush1.msra.mxu0 0.0
    %338 = vmatprep.subr.mxu0 0.0
    %339 = vmatpush1.msra.mxu0 0.0
    %340 = vmatprep.subr.mxu0 0.0
    %341 = vmatpush1.msra.mxu0 0.0
    %342 = vmatprep.subr.mxu0 0.0
    %343 = vmatpush1.msra.mxu0 0.0
    %344 = vmatprep.subr.mxu0 0.0
    %345 = vmatpush1.msra.mxu0 0.0
    %346 = vmatprep.subr.mxu0 0.0
    %347 = vmatpush1.msra.mxu0 0.0
    %348 = vmatprep.subr.mxu0 0.0
    %349 = vmatpush1.msra.mxu0 0.0
    %350 = vmatprep.subr.mxu0 0.0
    %351 = vmatpush1.msra.mxu0 0.0
    %352 = vmatprep.subr.mxu0 0.0
    %353 = vmatpush1.msra.mxu0 0.0
    %354 = vmatprep.subr.mxu0 0.0
    %355 = vmatpush1.msra.mxu0 0.0
    %356 = vmatprep.subr.mxu0 0.0
    %357 = vmatpush1.msra.mxu0 0.0
    %358 = vmatprep.subr.mxu0 0.0
    %359 = vmatpush1.msra.mxu0 0.0
    %360 = vmatprep.subr.mxu0 0.0
    %361 = vmatpush1.msra.mxu0 0.0
    %362 = vmatprep.subr.mxu0 0.0
    %363 = vmatpush1.msra.mxu0 0.0
    %364 = vmatprep.subr.mxu0 0.0
    %365 = vmatpush1.msra.mxu0 0.0
    %366 = vmatprep.subr.mxu0 0.0
    %367 = vmatpush1.msra.mxu0 0.0
    %368 = vmatprep.subr.mxu0 0.0
    %369 = vmatpush1.msra.mxu0 0.0
    %370 = vmatprep.subr.mxu0 0.0
    %371 = vmatpush1.msra.mxu0 0.0
    %372 = vmatprep.subr.mxu0 0.0
    %373 = vmatpush1.msra.mxu0 0.0
    %374 = vmatprep.subr.mxu0 0.0
    %375 = vmatpush1.msra.mxu0 0.0
    %376 = vmatprep.mubr.f32.mxu0 0.0
    %377 = vmatmul.mubr.f32.gmra.mrb[0].mxu0 %v307
    %v378 = vpop.f32.mrb[0].mxu0
    %v379 = vadd.f32 0.0, %v378
    %v380 = vpop.f32.mrb[0].mxu0
    %381 = vmatprep.mubr.f32.mxu0 0.0
    %382 = vmatmul.mubr.f32.gmra.mrb[0].mxu0 %v310
    %v383 = vpop.f32.mrb[0].mxu0
    %v384 = vadd.f32 0.0, %v383
    %v385 = vpop.f32.mrb[0].mxu0
    %386 = vdwg.mxu0
    %v387 = vmax.f32 %v379, 0.0
    %v388 = vmax.f32 %v384, 0.0
    %v389 = vld [vmem:[#allocation2 + $0x30] sm:$0xff]
    %v390 = vld [vmem:[#allocation2 + $0x38] sm:$0xff]
    %v391 = vmul.f32 %v389, %v387
    %v392 = vmul.f32 %v390, %v388
    %vm393 = vcmask 195584
    %v394 = vsel %vm393, %v391, 0.0
    %395 = vadd.xlane.f32.xlu0 %v394
    %v396 = vpop.xlane.xlu0 %395
    %v397 = vsel %vm393, %v392, 0.0
    %398 = vadd.xlane.f32.xlu0 %v397
    %v399 = vpop.xlane.xlu0 %398
    %v400 = vrot.slane %v396, 4
    %v401 = vadd.f32 %v396, %v400
    %v402 = vrot.slane %v401, 2
    %v403 = vadd.f32 %v401, %v402
    %v404 = vrot.slane %v403, 1
    %v405 = vadd.f32 %v403, %v404
    %v406 = vrot.slane %v399, 4
    %v407 = vadd.f32 %v399, %v406
    %v408 = vrot.slane %v407, 2
    %v409 = vadd.f32 %v407, %v408
    %v410 = vrot.slane %v409, 1
    %v411 = vadd.f32 %v409, %v410
    %vm412 = vcmask 1040384
    %v413 = vsel %vm412, %v405, %v411
    %v414 = vld [vmem:[#allocation2 + $0x40] sm:$0x3]
    %v415 = vadd.f32 %v413, %v414
    %vm416 = vcmask 1024
    %417 = vst.msk [vmem:[%s2] sm:$0x3] %vm416, %v415
    // Predicated region
    $region14: #{forward.1} parent=1 // pred_check
      _
    $region15: #{forward.1} parent=1 // pred_check_branch
      %419 = sbr.rel (0) target = $region17
    $region16: #{forward.1} parent=1 // pred_region
      _
    $region17: #{forward.1} parent=1 // pred_fallthru
      _
    // Predicated region
    $region18: #{forward.1} parent=1 // pred_check
      _
    $region19: #{forward.1} parent=1 // pred_check_branch
      %421 = sbr.rel (0) target = $region21
    $region20: #{forward.1} parent=1 // pred_region
      _
    $region21: #{forward.1} parent=1 // pred_fallthru
      _
    %422 = vsyncpa [#allocation3], 1

</llo_original>
